<compile_context>
chip_gen: v7x
topology: tpu7x:2x2x1
jax: 0.10.0
libtpu: 0.0.40
codegen_flags: <defaults>
</compile_context>

<pallas_src>
import functools

import jax
import jax.numpy as jnp
from jax import lax
from jax.experimental import pallas as pl
from jax.experimental.pallas import tpu as pltpu

ALPHA = 0.75
GAMMA = 2.0

_LANES = 128
_SUBLANES = 8
_MAX_BLOCK_ROWS = 1024  # 1024 x 128 f32 block = 512 KiB per input


def _focal_loss_kernel(x_ref, t_ref, o_ref, *, alpha, gamma, rows):
    i = pl.program_id(0)
    block_rows = x_ref.shape[0]

    # Cast to f32 inside the kernel (inputs may arrive as bf16 etc.).
    p = x_ref[...].astype(jnp.float32)
    t = t_ref[...].astype(jnp.float32)

    # BCELoss(reduction='none'); PyTorch clamps the log terms at -100.
    log_p = jnp.maximum(jnp.log(p), -100.0)
    log_1mp = jnp.maximum(jnp.log(1.0 - p), -100.0)
    bce = -(t * log_p + (1.0 - t) * log_1mp)

    pt = jnp.exp(-bce)
    one_minus_pt = 1.0 - pt
    # Avoid jnp.power (exp/log on the EUP) for integer gamma.
    if gamma == 2.0:
        mod = one_minus_pt * one_minus_pt
    elif float(gamma).is_integer():
        mod = lax.integer_pow(one_minus_pt, int(gamma))
    else:
        mod = one_minus_pt ** gamma
    focal = alpha * mod * bce

    # Mask rows past the true extent (ragged last block reads undefined data;
    # the select drops any NaN/Inf that data may have produced).  Only emitted
    # when the block does not evenly divide the row count.
    if rows % block_rows != 0:
        row_ids = lax.broadcasted_iota(jnp.int32, (block_rows, _LANES), 0)
        mask = (row_ids + i * block_rows) < rows
        focal = jnp.where(mask, focal, 0.0)

    # Tile-aligned partial reduction: (bR,128) -> (bR/8, 8, 128) -> (8, 128).
    partial = jnp.sum(
        focal.reshape(block_rows // _SUBLANES, _SUBLANES, _LANES), axis=0
    )
    o_ref[...] = partial.reshape(1, _SUBLANES, _LANES)


def focal_loss(inputs, targets, alpha=ALPHA, gamma=GAMMA):
    """Pallas TPU implementation of FocalLoss.forward. Returns a scalar f32."""
    assert inputs.shape == targets.shape
    n = inputs.size

    x = inputs.reshape(-1)
    t = targets.reshape(-1)

    # Only pad a <128-element tail when n is not lane aligned.  Padding with
    # (p=1, t=1) contributes exactly 0 to the loss.  Typical image tensors hit
    # the zero-copy path (no pad at all).
    rem = n % _LANES
    if rem:
        pad = _LANES - rem
        x = jnp.concatenate([x, jnp.ones((pad,), x.dtype)])
        t = jnp.concatenate([t, jnp.ones((pad,), t.dtype)])

    rows = x.size // _LANES
    x2 = x.reshape(rows, _LANES)
    t2 = t.reshape(rows, _LANES)

    block_rows = min(
        _MAX_BLOCK_ROWS, ((rows + _SUBLANES - 1) // _SUBLANES) * _SUBLANES
    )
    n_blocks = pl.cdiv(rows, block_rows)

    kernel = functools.partial(
        _focal_loss_kernel, alpha=alpha, gamma=gamma, rows=rows
    )

    partials = pl.pallas_call(
        kernel,
        out_shape=jax.ShapeDtypeStruct((n_blocks, _SUBLANES, _LANES), jnp.float32),
        grid_spec=pltpu.PrefetchScalarGridSpec(
            num_scalar_prefetch=0,
            grid=(n_blocks,),
            in_specs=[
                pl.BlockSpec((block_rows, _LANES), lambda i: (i, 0)),
                pl.BlockSpec((block_rows, _LANES), lambda i: (i, 0)),
            ],
            out_specs=pl.BlockSpec((1, _SUBLANES, _LANES), lambda i: (i, 0, 0)),
        ),
        compiler_params=pltpu.CompilerParams(
            dimension_semantics=("parallel",),  # independent per-block partials
        ),
    )(x2, t2)

    # Final mean over the true (unpadded) element count.
    return (jnp.sum(partials) / n).astype(jnp.float32)


def focal_loss_ref(inputs, targets, alpha=ALPHA, gamma=GAMMA):
    """Pure-JAX reference mirroring the PyTorch module."""
    p = inputs.astype(jnp.float32)
    t = targets.astype(jnp.float32)
    log_p = jnp.maximum(jnp.log(p), -100.0)
    log_1mp = jnp.maximum(jnp.log(1.0 - p), -100.0)
    bce = -(t * log_p + (1.0 - t) * log_1mp)
    pt = jnp.exp(-bce)
    return jnp.mean(alpha * (1.0 - pt) ** gamma * bce)


if __name__ == "__main__":
    key = jax.random.PRNGKey(0)
    k1, k2 = jax.random.split(key)

    # NCHW probabilities and binary targets, small shape: (2, 4, 16, 16).
    shape = (2, 4, 16, 16)
    inputs = jax.nn.sigmoid(jax.random.normal(k1, shape, dtype=jnp.float32))
    targets = (jax.random.uniform(k2, shape) > 0.5).astype(jnp.float32)

    out = focal_loss(inputs, targets)
    out = jax.block_until_ready(out)

    ref = focal_loss_ref(inputs, targets)
    assert jnp.allclose(out, ref, rtol=1e-5, atol=1e-6), (out, ref)

    print("KERNEL_OK")
</pallas_src>

<mosaic_0001>
module attributes {stable_mosaic.version = 11 : i64} {
  func.func @_focal_loss_kernel(%arg0: i32, %arg1: memref<16x128xf32, #tpu.memory_space<vmem>>, %arg2: memref<16x128xf32, #tpu.memory_space<vmem>>, %arg3: memref<1x8x128xf32, #tpu.memory_space<vmem>>) attributes {dimension_semantics = [#tpu.dimension_semantics<parallel>], iteration_bounds = array<i64: 1>, scalar_prefetch = 0 : i64, scratch_operands = 0 : i64, tpu.core_type = #tpu.core_type<tc>, window_params = [{transform_indices = @transform_0, window_bounds = array<i64: 16, 128>}, {transform_indices = @transform_1, window_bounds = array<i64: 16, 128>}, {transform_indices = @transform_2, window_bounds = array<i64: 1, 8, 128>}]} {
    %c0 = arith.constant 0 : index
    %c0_0 = arith.constant 0 : index
    %0 = vector.load %arg1[%c0, %c0_0] : memref<16x128xf32, #tpu.memory_space<vmem>>, vector<16x128xf32>
    %c0_1 = arith.constant 0 : index
    %c0_2 = arith.constant 0 : index
    %1 = vector.load %arg2[%c0_1, %c0_2] : memref<16x128xf32, #tpu.memory_space<vmem>>, vector<16x128xf32>
    %2 = math.log %0 : vector<16x128xf32>
    %cst = arith.constant -1.000000e+02 : f32
    %3 = vector.broadcast %cst : f32 to vector<16x128xf32>
    %4 = arith.maximumf %2, %3 : vector<16x128xf32>
    %cst_3 = arith.constant 1.000000e+00 : f32
    %5 = vector.broadcast %cst_3 : f32 to vector<16x128xf32>
    %6 = arith.subf %5, %0 : vector<16x128xf32>
    %7 = math.log %6 : vector<16x128xf32>
    %cst_4 = arith.constant -1.000000e+02 : f32
    %8 = vector.broadcast %cst_4 : f32 to vector<16x128xf32>
    %9 = arith.maximumf %7, %8 : vector<16x128xf32>
    %10 = arith.mulf %1, %4 : vector<16x128xf32>
    %cst_5 = arith.constant 1.000000e+00 : f32
    %11 = vector.broadcast %cst_5 : f32 to vector<16x128xf32>
    %12 = arith.subf %11, %1 : vector<16x128xf32>
    %13 = arith.mulf %12, %9 : vector<16x128xf32>
    %14 = arith.addf %10, %13 : vector<16x128xf32>
    %cst_6 = arith.constant 0.000000e+00 : f32
    %15 = vector.broadcast %cst_6 : f32 to vector<16x128xf32>
    %16 = arith.subf %15, %14 : vector<16x128xf32>
    %cst_7 = arith.constant 0.000000e+00 : f32
    %17 = vector.broadcast %cst_7 : f32 to vector<16x128xf32>
    %18 = arith.subf %17, %16 : vector<16x128xf32>
    %19 = math.exp %18 : vector<16x128xf32>
    %cst_8 = arith.constant 1.000000e+00 : f32
    %20 = vector.broadcast %cst_8 : f32 to vector<16x128xf32>
    %21 = arith.subf %20, %19 : vector<16x128xf32>
    %22 = arith.mulf %21, %21 : vector<16x128xf32>
    %cst_9 = arith.constant 7.500000e-01 : f32
    %23 = vector.broadcast %cst_9 : f32 to vector<16x128xf32>
    %24 = arith.mulf %23, %22 : vector<16x128xf32>
    %25 = arith.mulf %24, %16 : vector<16x128xf32>
    %26 = vector.shape_cast %25 : vector<16x128xf32> to vector<2x8x128xf32>
    %cst_10 = arith.constant dense<0.000000e+00> : vector<8x128xf32>
    %27 = vector.multi_reduction <add>, %26, %cst_10 [0] : vector<2x8x128xf32> to vector<8x128xf32>
    %28 = vector.shape_cast %27 : vector<8x128xf32> to vector<1x8x128xf32>
    %c0_11 = arith.constant 0 : index
    %c0_12 = arith.constant 0 : index
    %c0_13 = arith.constant 0 : index
    %29 = vector.load %arg3[%c0_11, %c0_12, %c0_13] : memref<1x8x128xf32, #tpu.memory_space<vmem>>, vector<1x8x128xf32>
    tpu.vector_store %arg3[%c0_11, %c0_12, %c0_13], %28 {strides = array<i32>} : memref<1x8x128xf32, #tpu.memory_space<vmem>>, vector<1x8x128xf32>,
    return
  }
  func.func @transform_0(%arg0: i32) -> (i32, i32) {
    %c0_i32 = arith.constant 0 : i32
    %c0_i32_0 = arith.constant 0 : i32
    return %arg0, %c0_i32 : i32, i32
  }
  func.func @transform_1(%arg0: i32) -> (i32, i32) {
    %c0_i32 = arith.constant 0 : i32
    %c0_i32_0 = arith.constant 0 : i32
    return %arg0, %c0_i32 : i32, i32
  }
  func.func @transform_2(%arg0: i32) -> (i32, i32, i32) {
    %c0_i32 = arith.constant 0 : i32
    %c0_i32_0 = arith.constant 0 : i32
    %c0_i32_1 = arith.constant 0 : i32
    return %arg0, %c0_i32, %c0_i32_0 : i32, i32, i32
  }
}

</mosaic_0001>

<llo_original>
// kernel: tpu_custom_call.1
$region0: #{tpu_custom_call.1}
  #allocation0 [shape = 'u32[]', space=smem, size = 0x4, offset = 0x4, fixed_abs, tag = 'smem constant byte address 0x4 - core index']
  #allocation1 [shape = 'u32[144,128]{1,0:T(1,128)}', space=vmem, size = 0x12000, scoped, tag = 'internal scratch']
  %s0 = inlined_call_operand.hbm [shape: f32[16,128], index: 0, kind: input, shape index: {}]
  %s1 = inlined_call_operand.hbm [shape: f32[16,128], index: 1, kind: input, shape index: {}]
  %s2 = inlined_call_operand.hbm [shape: f32[1,8,128], index: 2, kind: output, shape index: {}]
  %s3 = sld [smem:[#allocation0]]
  $region26: #{tpu_custom_call.1} parent=0
    _
  %s5 = ssub.s32 1, %s3
  %s6 = scalar_select 0, %s5, %s3
  $region1: #{tpu_custom_call.1} parent=0
    #allocation2 [shape = 'u8[8192]{0}', space=vmem, size = 0x2000, scoped, tag = 'input window, operand 0, single buffered']
    #allocation3 [shape = 's32[1]{0}', space=sflag, size = 0x4, scoped, tag = 'scoped memory for tpu_custom_call.1']
    #allocation4 [shape = 's32[1]{0}', space=sflag, size = 0x4, scoped, tag = 'scoped memory for tpu_custom_call.1']
    #allocation5 [shape = 'u8[8192]{0}', space=vmem, size = 0x2000, scoped, tag = 'input window, operand 1, single buffered']
    #allocation6 [shape = 's32[1]{0}', space=sflag, size = 0x4, scoped, tag = 'scoped memory for tpu_custom_call.1']
    #allocation7 [shape = 'u8[4096]{0}', space=vmem, size = 0x1000, scoped, tag = 'output window, operand 0, single buffered']
    %7 = vsyncpa [#allocation3], 0
    %8 = vsyncpa [#allocation6], 0
    %9 = vsyncpa [#allocation4], 0
    // Predicated region
    $region2: #{tpu_custom_call.1} parent=1 // pred_check
      _
    $region3: #{tpu_custom_call.1} parent=1 // pred_check_branch
      %11 = sbr.rel (0) target = $region5
    $region4: #{tpu_custom_call.1} parent=1 // pred_region
      %s13 = ssub.s32 256, 256
      %14 = vsyncadd [#allocation3], %s13
      %s15 = sshll.u32 [#allocation2], 4
      %s16 = int_to_ptr.vmem [resolvable:$true] %s15
      %21 = dma.hbm_to_vmem [thread:$0]  %s0, 256, %s16, [#allocation3], 128, 128, 8
    $region5: #{tpu_custom_call.1} parent=1 // pred_fallthru
      _
    // Predicated region
    $region6: #{tpu_custom_call.1} parent=1 // pred_check
      _
    $region7: #{tpu_custom_call.1} parent=1 // pred_check_branch
      %23 = sbr.rel (0) target = $region9
    $region8: #{tpu_custom_call.1} parent=1 // pred_region
      %s25 = ssub.s32 256, 256
      %26 = vsyncadd [#allocation6], %s25
      %s27 = sshll.u32 [#allocation5], 4
      %s28 = int_to_ptr.vmem [resolvable:$true] %s27
      %33 = dma.hbm_to_vmem [thread:$0]  %s1, 256, %s28, [#allocation6], 128, 128, 8
    $region9: #{tpu_custom_call.1} parent=1 // pred_fallthru
      _
    // Predicated region
    $region10: #{tpu_custom_call.1} parent=1 // pred_check
      _
    $region11: #{tpu_custom_call.1} parent=1 // pred_check_branch
      %35 = sbr.rel (0) target = $region13
    $region12: #{tpu_custom_call.1} parent=1 // pred_region
      %36 = dma.done [#allocation3], 256
    $region13: #{tpu_custom_call.1} parent=1 // pred_fallthru
      _
    // Predicated region
    $region14: #{tpu_custom_call.1} parent=1 // pred_check
      _
    $region15: #{tpu_custom_call.1} parent=1 // pred_check_branch
      %38 = sbr.rel (0) target = $region17
    $region16: #{tpu_custom_call.1} parent=1 // pred_region
      %39 = dma.done [#allocation6], 256
    $region17: #{tpu_custom_call.1} parent=1 // pred_fallthru
      _
    %v40 = vld [vmem:[#allocation2] sm:$0xff]
    %v41 = vld [vmem:[#allocation2 + $0x8] sm:$0xff]
    %v42 = vld [vmem:[#allocation5] sm:$0xff]
    %v43 = vld [vmem:[#allocation5 + $0x8] sm:$0xff]
    %v44 = vlog2.pop %v40
    %v45 = vmul.f32 %v44, 0.6931472
    %v46 = vlog2.pop %v41
    %v47 = vmul.f32 %v46, 0.6931472
    %v48 = vmax.f32 %v45, -100.0
    %v49 = vmax.f32 %v47, -100.0
    %v50 = vsub.f32 1.0, %v40
    %v51 = vsub.f32 1.0, %v41
    %v52 = vlog2.pop %v50
    %v53 = vmul.f32 %v52, 0.6931472
    %v54 = vlog2.pop %v51
    %v55 = vmul.f32 %v54, 0.6931472
    %v56 = vmax.f32 %v53, -100.0
    %v57 = vmax.f32 %v55, -100.0
    %v58 = vmul.f32 %v42, %v48
    %v59 = vmul.f32 %v43, %v49
    %v60 = vsub.f32 1.0, %v42
    %v61 = vsub.f32 1.0, %v43
    %v62 = vmul.f32 %v60, %v56
    %v63 = vmul.f32 %v61, %v57
    %v64 = vadd.f32 %v58, %v62
    %v65 = vadd.f32 %v59, %v63
    %v66 = vsub.f32 0.0, %v64
    %v67 = vsub.f32 0.0, %v65
    %v68 = vsub.f32 0.0, %v66
    %v69 = vsub.f32 0.0, %v67
    %v70 = vmul.f32 %v68, 1.442695
    %v71 = vpow.pop %v70
    %v72 = vmul.f32 %v69, 1.442695
    %v73 = vpow.pop %v72
    %v74 = vsub.f32 1.0, %v71
    %v75 = vsub.f32 1.0, %v73
    %v76 = vmul.f32 %v74, %v74
    %v77 = vmul.f32 %v75, %v75
    %v78 = vmul.f32 %v76, 0.75
    %v79 = vmul.f32 %v77, 0.75
    %v80 = vmul.f32 %v78, %v66
    %v81 = vmul.f32 %v79, %v67
    %v82 = vadd.f32 %v80, %v81
    %83 = vst [vmem:[#allocation7] sm:$0xff] %v82
    // Predicated region
    $region18: #{tpu_custom_call.1} parent=1 // pred_check
      _
    $region19: #{tpu_custom_call.1} parent=1 // pred_check_branch
      %85 = sbr.rel (0) target = $region21
    $region20: #{tpu_custom_call.1} parent=1 // pred_region
      %s87 = ssub.s32 128, 128
      %88 = vsyncadd [#allocation4], %s87
      %s90 = sshll.u32 [#allocation7], 4
      %s91 = int_to_ptr.vmem [resolvable:$true] %s90
      %93 = dma.vmem_to_hbm [thread:$0]  %s91, 128, %s2, [#allocation4]
    $region21: #{tpu_custom_call.1} parent=1 // pred_fallthru
      _
    // Predicated region
    $region22: #{tpu_custom_call.1} parent=1 // pred_check
      _
    $region23: #{tpu_custom_call.1} parent=1 // pred_check_branch
      %95 = sbr.rel (0) target = $region25
    $region24: #{tpu_custom_call.1} parent=1 // pred_region
      %96 = dma.done [#allocation4], 128
    $region25: #{tpu_custom_call.1} parent=1 // pred_fallthru
      _
    %97 = vsyncpa [#allocation3], 1
    %98 = vsyncpa [#allocation6], 1
    %99 = vsyncpa [#allocation4], 1

</llo_original>
